<compile_context>
chip_gen: v6e
topology: v6e:2x2x1
jax: 0.10.0
libtpu: 0.0.40
codegen_flags: <defaults>
</compile_context>

<pallas_src>
import functools

import jax
import jax.numpy as jnp
import numpy as np
from jax.experimental import pallas as pl
from jax.experimental.pallas import tpu as pltpu

# Stand-in for config.yaml's `topics` (DUMMY_TOPICS) — defined in-script.
DUMMY_TOPICS = [
    "sports", "politics", "technology", "health",
    "finance", "entertainment", "science", "travel",
]

_ROWS = 8      # sublanes of one f32 vreg -> 8 independent draws per launch
_LANES = 128   # lanes of one f32 vreg


def _i32(v: int):
    """32-bit constant (given as an unsigned value) as an int32 scalar."""
    return jnp.int32(np.uint32(v & 0xFFFFFFFF).astype(np.int32))


def _srl(x, k: int):
    """Logical right shift for int32 arrays (arithmetic shift + mask)."""
    return (x >> k) & ((1 << (32 - k)) - 1)


def _mix(x):
    """xorshift-multiply integer hash (mod 2^32, on int32 bit patterns)."""
    x = x ^ _srl(x, 16)
    x = x * _i32(0x7FEB352D)
    x = x ^ _srl(x, 15)
    x = x * _i32(0x846CA68B)
    x = x ^ _srl(x, 16)
    return x


def _rng_softmax_kernel(seed_ref, probs_ref, *, num_classes: int):
    """Fused: counter-hash PRNG -> ~N(0,1) logits -> masked stable softmax.

    seed_ref : SMEM (1,) int32 per-launch seed (base_seed + launch counter).
    probs_ref: VMEM (8, num_classes) f32; each row is one independent draw.
    """
    shape = (_ROWS, _LANES)                       # one full f32 vreg
    seed = seed_ref[0]

    row = jax.lax.broadcasted_iota(jnp.int32, shape, 0)
    lane = jax.lax.broadcasted_iota(jnp.int32, shape, 1)
    base = _mix(seed * _i32(0x9E3779B9)
                + row * _i32(0x85EBCA6B)
                + lane * _i32(0xC2B2AE35))

    # ~N(0,1) via CLT: sum of 12 independent U(0,1) minus 6.
    # TODO(synk): torch's global-RNG bitstream has no Pallas equivalent; this
    # hash-PRNG normal is deterministic per seed but not bit-matched (and has
    # slightly truncated tails) — fine for a dummy classifier.
    acc = jnp.zeros(shape, jnp.float32)
    for k in range(12):
        bits = _mix(base + _i32((k + 1) * 0x9E3779B9))
        u = (_srl(bits, 9).astype(jnp.float32) + 0.5) * jnp.float32(1.0 / (1 << 23))
        acc = acc + u
    logits = acc - 6.0

    # Mask padded lanes to -inf so they contribute exp(-inf) == 0 to the sum.
    masked = jnp.where(lane < num_classes, logits, -jnp.inf)

    # Numerically-stable softmax over the lane (class) axis; exact division.
    m = jnp.max(masked, axis=-1, keepdims=True)
    e = jnp.exp(masked - m)
    s = jnp.sum(e, axis=-1, keepdims=True)
    probs = e / s

    # Fused slice: store only the real classes (sub-128-lane one-shot store).
    probs_ref[...] = probs[:, :num_classes]


def _forward_impl(counter, *, base_seed: int, num_classes: int):
    """One grid-less pallas_call -> 8 probability rows + updated counter."""
    seed_arr = jnp.reshape(jnp.int32(base_seed) + counter, (1,))
    batch = pl.pallas_call(
        functools.partial(_rng_softmax_kernel, num_classes=num_classes),
        out_shape=jax.ShapeDtypeStruct((_ROWS, num_classes), jnp.float32),
        in_specs=[pl.BlockSpec(memory_space=pltpu.MemorySpace.SMEM)],
        out_specs=pl.BlockSpec(memory_space=pltpu.MemorySpace.VMEM),
    )(seed_arr)
    rows = tuple(batch[i] for i in range(_ROWS))   # split inside jit: no per-call slice op
    return rows, counter + jnp.int32(1)


class DummyClassifier:
    """JAX/Pallas port of the PyTorch DummyClassifier."""

    def __init__(self, class_labels=None, seed: int = 0) -> None:
        self.class_labels = (
            list(class_labels) if class_labels is not None else list(DUMMY_TOPICS)
        )
        self.num_classes = len(self.class_labels)
        if not (1 <= self.num_classes <= _LANES):
            raise ValueError(
                f"num_classes={self.num_classes} must be in [1, {_LANES}] "
                "for the single-vreg kernel"
            )
        # Device-resident launch counter: no per-call host->device transfer.
        self._counter = jnp.int32(0)
        self._cache: list[jax.Array] = []
        self._forward = jax.jit(
            functools.partial(
                _forward_impl,
                base_seed=int(seed) & 0x7FFFFFFF,
                num_classes=self.num_classes,
            )
        )

    def forward(self, text: str) -> jax.Array:
        del text  # never used, exactly as in the PyTorch module
        if not self._cache:
            rows, self._counter = self._forward(self._counter)
            self._cache = list(rows)
        return self._cache.pop(0)

    __call__ = forward


if __name__ == "__main__":
    # Deterministic "inputs": the forward takes a string it ignores; the only
    # numeric input is the base seed, derived deterministically from PRNGKey(0).
    base_seed = int(jax.random.randint(jax.random.PRNGKey(0), (), 0, 2**31 - 1))
    model = DummyClassifier(seed=base_seed)

    probs = jax.block_until_ready(model("pallas kernels are neat"))
    assert probs.shape == (model.num_classes,), probs.shape
    assert probs.dtype == jnp.float32, probs.dtype
    assert bool(jnp.all(probs >= 0.0))
    assert bool(jnp.isclose(jnp.sum(probs), 1.0, atol=1e-5)), float(jnp.sum(probs))

    # Second call: served from the same launch's cached rows, still a valid
    # pmf, and a different draw than the first call.
    probs2 = jax.block_until_ready(model("second call"))
    assert probs2.shape == (model.num_classes,)
    assert bool(jnp.isclose(jnp.sum(probs2), 1.0, atol=1e-5))
    assert not bool(jnp.allclose(probs, probs2))

    # Exhaust the cached batch so a second kernel launch (new counter) happens.
    for i in range(10):
        last = model(f"call {i}")
    last = jax.block_until_ready(last)
    assert last.shape == (model.num_classes,)
    assert bool(jnp.isclose(jnp.sum(last), 1.0, atol=1e-5))

    print("KERNEL_OK")
</pallas_src>

<mosaic_0001>
module attributes {stable_mosaic.version = 11 : i64} {
  func.func @_rng_softmax_kernel(%arg0: memref<1xi32, #tpu.memory_space<smem>>, %arg1: memref<8x8xf32, #tpu.memory_space<vmem>>) attributes {dimension_semantics = [], scalar_prefetch = 0 : i64, scratch_operands = 0 : i64, tpu.core_type = #tpu.core_type<tc>} {
    %c0 = arith.constant 0 : index
    %0 = memref.load %arg0[%c0] : memref<1xi32, #tpu.memory_space<smem>>
    %1 = tpu.iota {dimensions = array<i32: 0>} : vector<8x128xi32>
    %2 = tpu.iota {dimensions = array<i32: 1>} : vector<8x128xi32>
    %c-1640531527_i32 = arith.constant -1640531527 : i32
    %3 = arith.muli %0, %c-1640531527_i32 : i32
    %c-2048144789_i32 = arith.constant -2048144789 : i32
    %4 = vector.broadcast %c-2048144789_i32 : i32 to vector<8x128xi32>
    %5 = arith.muli %1, %4 : vector<8x128xi32>
    %6 = vector.broadcast %3 : i32 to vector<8x128xi32>
    %7 = arith.addi %6, %5 : vector<8x128xi32>
    %c-1028477387_i32 = arith.constant -1028477387 : i32
    %8 = vector.broadcast %c-1028477387_i32 : i32 to vector<8x128xi32>
    %9 = arith.muli %2, %8 : vector<8x128xi32>
    %10 = arith.addi %7, %9 : vector<8x128xi32>
    %c16_i32 = arith.constant 16 : i32
    %11 = vector.broadcast %c16_i32 : i32 to vector<8x128xi32>
    %12 = arith.shrsi %10, %11 : vector<8x128xi32>
    %c65535_i32 = arith.constant 65535 : i32
    %13 = vector.broadcast %c65535_i32 : i32 to vector<8x128xi32>
    %14 = arith.andi %12, %13 : vector<8x128xi32>
    %15 = arith.xori %10, %14 : vector<8x128xi32>
    %c2146121005_i32 = arith.constant 2146121005 : i32
    %16 = vector.broadcast %c2146121005_i32 : i32 to vector<8x128xi32>
    %17 = arith.muli %15, %16 : vector<8x128xi32>
    %c15_i32 = arith.constant 15 : i32
    %18 = vector.broadcast %c15_i32 : i32 to vector<8x128xi32>
    %19 = arith.shrsi %17, %18 : vector<8x128xi32>
    %c131071_i32 = arith.constant 131071 : i32
    %20 = vector.broadcast %c131071_i32 : i32 to vector<8x128xi32>
    %21 = arith.andi %19, %20 : vector<8x128xi32>
    %22 = arith.xori %17, %21 : vector<8x128xi32>
    %c-2073254261_i32 = arith.constant -2073254261 : i32
    %23 = vector.broadcast %c-2073254261_i32 : i32 to vector<8x128xi32>
    %24 = arith.muli %22, %23 : vector<8x128xi32>
    %c16_i32_0 = arith.constant 16 : i32
    %25 = vector.broadcast %c16_i32_0 : i32 to vector<8x128xi32>
    %26 = arith.shrsi %24, %25 : vector<8x128xi32>
    %c65535_i32_1 = arith.constant 65535 : i32
    %27 = vector.broadcast %c65535_i32_1 : i32 to vector<8x128xi32>
    %28 = arith.andi %26, %27 : vector<8x128xi32>
    %29 = arith.xori %24, %28 : vector<8x128xi32>
    %cst = arith.constant 0.000000e+00 : f32
    %30 = vector.broadcast %cst : f32 to vector<8x128xf32>
    %c-1640531527_i32_2 = arith.constant -1640531527 : i32
    %31 = vector.broadcast %c-1640531527_i32_2 : i32 to vector<8x128xi32>
    %32 = arith.addi %29, %31 : vector<8x128xi32>
    %c16_i32_3 = arith.constant 16 : i32
    %33 = vector.broadcast %c16_i32_3 : i32 to vector<8x128xi32>
    %34 = arith.shrsi %32, %33 : vector<8x128xi32>
    %c65535_i32_4 = arith.constant 65535 : i32
    %35 = vector.broadcast %c65535_i32_4 : i32 to vector<8x128xi32>
    %36 = arith.andi %34, %35 : vector<8x128xi32>
    %37 = arith.xori %32, %36 : vector<8x128xi32>
    %c2146121005_i32_5 = arith.constant 2146121005 : i32
    %38 = vector.broadcast %c2146121005_i32_5 : i32 to vector<8x128xi32>
    %39 = arith.muli %37, %38 : vector<8x128xi32>
    %c15_i32_6 = arith.constant 15 : i32
    %40 = vector.broadcast %c15_i32_6 : i32 to vector<8x128xi32>
    %41 = arith.shrsi %39, %40 : vector<8x128xi32>
    %c131071_i32_7 = arith.constant 131071 : i32
    %42 = vector.broadcast %c131071_i32_7 : i32 to vector<8x128xi32>
    %43 = arith.andi %41, %42 : vector<8x128xi32>
    %44 = arith.xori %39, %43 : vector<8x128xi32>
    %c-2073254261_i32_8 = arith.constant -2073254261 : i32
    %45 = vector.broadcast %c-2073254261_i32_8 : i32 to vector<8x128xi32>
    %46 = arith.muli %44, %45 : vector<8x128xi32>
    %c16_i32_9 = arith.constant 16 : i32
    %47 = vector.broadcast %c16_i32_9 : i32 to vector<8x128xi32>
    %48 = arith.shrsi %46, %47 : vector<8x128xi32>
    %c65535_i32_10 = arith.constant 65535 : i32
    %49 = vector.broadcast %c65535_i32_10 : i32 to vector<8x128xi32>
    %50 = arith.andi %48, %49 : vector<8x128xi32>
    %51 = arith.xori %46, %50 : vector<8x128xi32>
    %c9_i32 = arith.constant 9 : i32
    %52 = vector.broadcast %c9_i32 : i32 to vector<8x128xi32>
    %53 = arith.shrsi %51, %52 : vector<8x128xi32>
    %c8388607_i32 = arith.constant 8388607 : i32
    %54 = vector.broadcast %c8388607_i32 : i32 to vector<8x128xi32>
    %55 = arith.andi %53, %54 : vector<8x128xi32>
    %56 = arith.sitofp %55 : vector<8x128xi32> to vector<8x128xf32>
    %cst_11 = arith.constant 5.000000e-01 : f32
    %57 = vector.broadcast %cst_11 : f32 to vector<8x128xf32>
    %58 = arith.addf %56, %57 : vector<8x128xf32>
    %cst_12 = arith.constant 1.1920929E-7 : f32
    %59 = vector.broadcast %cst_12 : f32 to vector<8x128xf32>
    %60 = arith.mulf %58, %59 : vector<8x128xf32>
    %61 = arith.addf %30, %60 : vector<8x128xf32>
    %c1013904242_i32 = arith.constant 1013904242 : i32
    %62 = vector.broadcast %c1013904242_i32 : i32 to vector<8x128xi32>
    %63 = arith.addi %29, %62 : vector<8x128xi32>
    %c16_i32_13 = arith.constant 16 : i32
    %64 = vector.broadcast %c16_i32_13 : i32 to vector<8x128xi32>
    %65 = arith.shrsi %63, %64 : vector<8x128xi32>
    %c65535_i32_14 = arith.constant 65535 : i32
    %66 = vector.broadcast %c65535_i32_14 : i32 to vector<8x128xi32>
    %67 = arith.andi %65, %66 : vector<8x128xi32>
    %68 = arith.xori %63, %67 : vector<8x128xi32>
    %c2146121005_i32_15 = arith.constant 2146121005 : i32
    %69 = vector.broadcast %c2146121005_i32_15 : i32 to vector<8x128xi32>
    %70 = arith.muli %68, %69 : vector<8x128xi32>
    %c15_i32_16 = arith.constant 15 : i32
    %71 = vector.broadcast %c15_i32_16 : i32 to vector<8x128xi32>
    %72 = arith.shrsi %70, %71 : vector<8x128xi32>
    %c131071_i32_17 = arith.constant 131071 : i32
    %73 = vector.broadcast %c131071_i32_17 : i32 to vector<8x128xi32>
    %74 = arith.andi %72, %73 : vector<8x128xi32>
    %75 = arith.xori %70, %74 : vector<8x128xi32>
    %c-2073254261_i32_18 = arith.constant -2073254261 : i32
    %76 = vector.broadcast %c-2073254261_i32_18 : i32 to vector<8x128xi32>
    %77 = arith.muli %75, %76 : vector<8x128xi32>
    %c16_i32_19 = arith.constant 16 : i32
    %78 = vector.broadcast %c16_i32_19 : i32 to vector<8x128xi32>
    %79 = arith.shrsi %77, %78 : vector<8x128xi32>
    %c65535_i32_20 = arith.constant 65535 : i32
    %80 = vector.broadcast %c65535_i32_20 : i32 to vector<8x128xi32>
    %81 = arith.andi %79, %80 : vector<8x128xi32>
    %82 = arith.xori %77, %81 : vector<8x128xi32>
    %c9_i32_21 = arith.constant 9 : i32
    %83 = vector.broadcast %c9_i32_21 : i32 to vector<8x128xi32>
    %84 = arith.shrsi %82, %83 : vector<8x128xi32>
    %c8388607_i32_22 = arith.constant 8388607 : i32
    %85 = vector.broadcast %c8388607_i32_22 : i32 to vector<8x128xi32>
    %86 = arith.andi %84, %85 : vector<8x128xi32>
    %87 = arith.sitofp %86 : vector<8x128xi32> to vector<8x128xf32>
    %cst_23 = arith.constant 5.000000e-01 : f32
    %88 = vector.broadcast %cst_23 : f32 to vector<8x128xf32>
    %89 = arith.addf %87, %88 : vector<8x128xf32>
    %cst_24 = arith.constant 1.1920929E-7 : f32
    %90 = vector.broadcast %cst_24 : f32 to vector<8x128xf32>
    %91 = arith.mulf %89, %90 : vector<8x128xf32>
    %92 = arith.addf %61, %91 : vector<8x128xf32>
    %c-626627285_i32 = arith.constant -626627285 : i32
    %93 = vector.broadcast %c-626627285_i32 : i32 to vector<8x128xi32>
    %94 = arith.addi %29, %93 : vector<8x128xi32>
    %c16_i32_25 = arith.constant 16 : i32
    %95 = vector.broadcast %c16_i32_25 : i32 to vector<8x128xi32>
    %96 = arith.shrsi %94, %95 : vector<8x128xi32>
    %c65535_i32_26 = arith.constant 65535 : i32
    %97 = vector.broadcast %c65535_i32_26 : i32 to vector<8x128xi32>
    %98 = arith.andi %96, %97 : vector<8x128xi32>
    %99 = arith.xori %94, %98 : vector<8x128xi32>
    %c2146121005_i32_27 = arith.constant 2146121005 : i32
    %100 = vector.broadcast %c2146121005_i32_27 : i32 to vector<8x128xi32>
    %101 = arith.muli %99, %100 : vector<8x128xi32>
    %c15_i32_28 = arith.constant 15 : i32
    %102 = vector.broadcast %c15_i32_28 : i32 to vector<8x128xi32>
    %103 = arith.shrsi %101, %102 : vector<8x128xi32>
    %c131071_i32_29 = arith.constant 131071 : i32
    %104 = vector.broadcast %c131071_i32_29 : i32 to vector<8x128xi32>
    %105 = arith.andi %103, %104 : vector<8x128xi32>
    %106 = arith.xori %101, %105 : vector<8x128xi32>
    %c-2073254261_i32_30 = arith.constant -2073254261 : i32
    %107 = vector.broadcast %c-2073254261_i32_30 : i32 to vector<8x128xi32>
    %108 = arith.muli %106, %107 : vector<8x128xi32>
    %c16_i32_31 = arith.constant 16 : i32
    %109 = vector.broadcast %c16_i32_31 : i32 to vector<8x128xi32>
    %110 = arith.shrsi %108, %109 : vector<8x128xi32>
    %c65535_i32_32 = arith.constant 65535 : i32
    %111 = vector.broadcast %c65535_i32_32 : i32 to vector<8x128xi32>
    %112 = arith.andi %110, %111 : vector<8x128xi32>
    %113 = arith.xori %108, %112 : vector<8x128xi32>
    %c9_i32_33 = arith.constant 9 : i32
    %114 = vector.broadcast %c9_i32_33 : i32 to vector<8x128xi32>
    %115 = arith.shrsi %113, %114 : vector<8x128xi32>
    %c8388607_i32_34 = arith.constant 8388607 : i32
    %116 = vector.broadcast %c8388607_i32_34 : i32 to vector<8x128xi32>
    %117 = arith.andi %115, %116 : vector<8x128xi32>
    %118 = arith.sitofp %117 : vector<8x128xi32> to vector<8x128xf32>
    %cst_35 = arith.constant 5.000000e-01 : f32
    %119 = vector.broadcast %cst_35 : f32 to vector<8x128xf32>
    %120 = arith.addf %118, %119 : vector<8x128xf32>
    %cst_36 = arith.constant 1.1920929E-7 : f32
    %121 = vector.broadcast %cst_36 : f32 to vector<8x128xf32>
    %122 = arith.mulf %120, %121 : vector<8x128xf32>
    %123 = arith.addf %92, %122 : vector<8x128xf32>
    %c2027808484_i32 = arith.constant 2027808484 : i32
    %124 = vector.broadcast %c2027808484_i32 : i32 to vector<8x128xi32>
    %125 = arith.addi %29, %124 : vector<8x128xi32>
    %c16_i32_37 = arith.constant 16 : i32
    %126 = vector.broadcast %c16_i32_37 : i32 to vector<8x128xi32>
    %127 = arith.shrsi %125, %126 : vector<8x128xi32>
    %c65535_i32_38 = arith.constant 65535 : i32
    %128 = vector.broadcast %c65535_i32_38 : i32 to vector<8x128xi32>
    %129 = arith.andi %127, %128 : vector<8x128xi32>
    %130 = arith.xori %125, %129 : vector<8x128xi32>
    %c2146121005_i32_39 = arith.constant 2146121005 : i32
    %131 = vector.broadcast %c2146121005_i32_39 : i32 to vector<8x128xi32>
    %132 = arith.muli %130, %131 : vector<8x128xi32>
    %c15_i32_40 = arith.constant 15 : i32
    %133 = vector.broadcast %c15_i32_40 : i32 to vector<8x128xi32>
    %134 = arith.shrsi %132, %133 : vector<8x128xi32>
    %c131071_i32_41 = arith.constant 131071 : i32
    %135 = vector.broadcast %c131071_i32_41 : i32 to vector<8x128xi32>
    %136 = arith.andi %134, %135 : vector<8x128xi32>
    %137 = arith.xori %132, %136 : vector<8x128xi32>
    %c-2073254261_i32_42 = arith.constant -2073254261 : i32
    %138 = vector.broadcast %c-2073254261_i32_42 : i32 to vector<8x128xi32>
    %139 = arith.muli %137, %138 : vector<8x128xi32>
    %c16_i32_43 = arith.constant 16 : i32
    %140 = vector.broadcast %c16_i32_43 : i32 to vector<8x128xi32>
    %141 = arith.shrsi %139, %140 : vector<8x128xi32>
    %c65535_i32_44 = arith.constant 65535 : i32
    %142 = vector.broadcast %c65535_i32_44 : i32 to vector<8x128xi32>
    %143 = arith.andi %141, %142 : vector<8x128xi32>
    %144 = arith.xori %139, %143 : vector<8x128xi32>
    %c9_i32_45 = arith.constant 9 : i32
    %145 = vector.broadcast %c9_i32_45 : i32 to vector<8x128xi32>
    %146 = arith.shrsi %144, %145 : vector<8x128xi32>
    %c8388607_i32_46 = arith.constant 8388607 : i32
    %147 = vector.broadcast %c8388607_i32_46 : i32 to vector<8x128xi32>
    %148 = arith.andi %146, %147 : vector<8x128xi32>
    %149 = arith.sitofp %148 : vector<8x128xi32> to vector<8x128xf32>
    %cst_47 = arith.constant 5.000000e-01 : f32
    %150 = vector.broadcast %cst_47 : f32 to vector<8x128xf32>
    %151 = arith.addf %149, %150 : vector<8x128xf32>
    %cst_48 = arith.constant 1.1920929E-7 : f32
    %152 = vector.broadcast %cst_48 : f32 to vector<8x128xf32>
    %153 = arith.mulf %151, %152 : vector<8x128xf32>
    %154 = arith.addf %123, %153 : vector<8x128xf32>
    %c387276957_i32 = arith.constant 387276957 : i32
    %155 = vector.broadcast %c387276957_i32 : i32 to vector<8x128xi32>
    %156 = arith.addi %29, %155 : vector<8x128xi32>
    %c16_i32_49 = arith.constant 16 : i32
    %157 = vector.broadcast %c16_i32_49 : i32 to vector<8x128xi32>
    %158 = arith.shrsi %156, %157 : vector<8x128xi32>
    %c65535_i32_50 = arith.constant 65535 : i32
    %159 = vector.broadcast %c65535_i32_50 : i32 to vector<8x128xi32>
    %160 = arith.andi %158, %159 : vector<8x128xi32>
    %161 = arith.xori %156, %160 : vector<8x128xi32>
    %c2146121005_i32_51 = arith.constant 2146121005 : i32
    %162 = vector.broadcast %c2146121005_i32_51 : i32 to vector<8x128xi32>
    %163 = arith.muli %161, %162 : vector<8x128xi32>
    %c15_i32_52 = arith.constant 15 : i32
    %164 = vector.broadcast %c15_i32_52 : i32 to vector<8x128xi32>
    %165 = arith.shrsi %163, %164 : vector<8x128xi32>
    %c131071_i32_53 = arith.constant 131071 : i32
    %166 = vector.broadcast %c131071_i32_53 : i32 to vector<8x128xi32>
    %167 = arith.andi %165, %166 : vector<8x128xi32>
    %168 = arith.xori %163, %167 : vector<8x128xi32>
    %c-2073254261_i32_54 = arith.constant -2073254261 : i32
    %169 = vector.broadcast %c-2073254261_i32_54 : i32 to vector<8x128xi32>
    %170 = arith.muli %168, %169 : vector<8x128xi32>
    %c16_i32_55 = arith.constant 16 : i32
    %171 = vector.broadcast %c16_i32_55 : i32 to vector<8x128xi32>
    %172 = arith.shrsi %170, %171 : vector<8x128xi32>
    %c65535_i32_56 = arith.constant 65535 : i32
    %173 = vector.broadcast %c65535_i32_56 : i32 to vector<8x128xi32>
    %174 = arith.andi %172, %173 : vector<8x128xi32>
    %175 = arith.xori %170, %174 : vector<8x128xi32>
    %c9_i32_57 = arith.constant 9 : i32
    %176 = vector.broadcast %c9_i32_57 : i32 to vector<8x128xi32>
    %177 = arith.shrsi %175, %176 : vector<8x128xi32>
    %c8388607_i32_58 = arith.constant 8388607 : i32
    %178 = vector.broadcast %c8388607_i32_58 : i32 to vector<8x128xi32>
    %179 = arith.andi %177, %178 : vector<8x128xi32>
    %180 = arith.sitofp %179 : vector<8x128xi32> to vector<8x128xf32>
    %cst_59 = arith.constant 5.000000e-01 : f32
    %181 = vector.broadcast %cst_59 : f32 to vector<8x128xf32>
    %182 = arith.addf %180, %181 : vector<8x128xf32>
    %cst_60 = arith.constant 1.1920929E-7 : f32
    %183 = vector.broadcast %cst_60 : f32 to vector<8x128xf32>
    %184 = arith.mulf %182, %183 : vector<8x128xf32>
    %185 = arith.addf %154, %184 : vector<8x128xf32>
    %c-1253254570_i32 = arith.constant -1253254570 : i32
    %186 = vector.broadcast %c-1253254570_i32 : i32 to vector<8x128xi32>
    %187 = arith.addi %29, %186 : vector<8x128xi32>
    %c16_i32_61 = arith.constant 16 : i32
    %188 = vector.broadcast %c16_i32_61 : i32 to vector<8x128xi32>
    %189 = arith.shrsi %187, %188 : vector<8x128xi32>
    %c65535_i32_62 = arith.constant 65535 : i32
    %190 = vector.broadcast %c65535_i32_62 : i32 to vector<8x128xi32>
    %191 = arith.andi %189, %190 : vector<8x128xi32>
    %192 = arith.xori %187, %191 : vector<8x128xi32>
    %c2146121005_i32_63 = arith.constant 2146121005 : i32
    %193 = vector.broadcast %c2146121005_i32_63 : i32 to vector<8x128xi32>
    %194 = arith.muli %192, %193 : vector<8x128xi32>
    %c15_i32_64 = arith.constant 15 : i32
    %195 = vector.broadcast %c15_i32_64 : i32 to vector<8x128xi32>
    %196 = arith.shrsi %194, %195 : vector<8x128xi32>
    %c131071_i32_65 = arith.constant 131071 : i32
    %197 = vector.broadcast %c131071_i32_65 : i32 to vector<8x128xi32>
    %198 = arith.andi %196, %197 : vector<8x128xi32>
    %199 = arith.xori %194, %198 : vector<8x128xi32>
    %c-2073254261_i32_66 = arith.constant -2073254261 : i32
    %200 = vector.broadcast %c-2073254261_i32_66 : i32 to vector<8x128xi32>
    %201 = arith.muli %199, %200 : vector<8x128xi32>
    %c16_i32_67 = arith.constant 16 : i32
    %202 = vector.broadcast %c16_i32_67 : i32 to vector<8x128xi32>
    %203 = arith.shrsi %201, %202 : vector<8x128xi32>
    %c65535_i32_68 = arith.constant 65535 : i32
    %204 = vector.broadcast %c65535_i32_68 : i32 to vector<8x128xi32>
    %205 = arith.andi %203, %204 : vector<8x128xi32>
    %206 = arith.xori %201, %205 : vector<8x128xi32>
    %c9_i32_69 = arith.constant 9 : i32
    %207 = vector.broadcast %c9_i32_69 : i32 to vector<8x128xi32>
    %208 = arith.shrsi %206, %207 : vector<8x128xi32>
    %c8388607_i32_70 = arith.constant 8388607 : i32
    %209 = vector.broadcast %c8388607_i32_70 : i32 to vector<8x128xi32>
    %210 = arith.andi %208, %209 : vector<8x128xi32>
    %211 = arith.sitofp %210 : vector<8x128xi32> to vector<8x128xf32>
    %cst_71 = arith.constant 5.000000e-01 : f32
    %212 = vector.broadcast %cst_71 : f32 to vector<8x128xf32>
    %213 = arith.addf %211, %212 : vector<8x128xf32>
    %cst_72 = arith.constant 1.1920929E-7 : f32
    %214 = vector.broadcast %cst_72 : f32 to vector<8x128xf32>
    %215 = arith.mulf %213, %214 : vector<8x128xf32>
    %216 = arith.addf %185, %215 : vector<8x128xf32>
    %c1401181199_i32 = arith.constant 1401181199 : i32
    %217 = vector.broadcast %c1401181199_i32 : i32 to vector<8x128xi32>
    %218 = arith.addi %29, %217 : vector<8x128xi32>
    %c16_i32_73 = arith.constant 16 : i32
    %219 = vector.broadcast %c16_i32_73 : i32 to vector<8x128xi32>
    %220 = arith.shrsi %218, %219 : vector<8x128xi32>
    %c65535_i32_74 = arith.constant 65535 : i32
    %221 = vector.broadcast %c65535_i32_74 : i32 to vector<8x128xi32>
    %222 = arith.andi %220, %221 : vector<8x128xi32>
    %223 = arith.xori %218, %222 : vector<8x128xi32>
    %c2146121005_i32_75 = arith.constant 2146121005 : i32
    %224 = vector.broadcast %c2146121005_i32_75 : i32 to vector<8x128xi32>
    %225 = arith.muli %223, %224 : vector<8x128xi32>
    %c15_i32_76 = arith.constant 15 : i32
    %226 = vector.broadcast %c15_i32_76 : i32 to vector<8x128xi32>
    %227 = arith.shrsi %225, %226 : vector<8x128xi32>
    %c131071_i32_77 = arith.constant 131071 : i32
    %228 = vector.broadcast %c131071_i32_77 : i32 to vector<8x128xi32>
    %229 = arith.andi %227, %228 : vector<8x128xi32>
    %230 = arith.xori %225, %229 : vector<8x128xi32>
    %c-2073254261_i32_78 = arith.constant -2073254261 : i32
    %231 = vector.broadcast %c-2073254261_i32_78 : i32 to vector<8x128xi32>
    %232 = arith.muli %230, %231 : vector<8x128xi32>
    %c16_i32_79 = arith.constant 16 : i32
    %233 = vector.broadcast %c16_i32_79 : i32 to vector<8x128xi32>
    %234 = arith.shrsi %232, %233 : vector<8x128xi32>
    %c65535_i32_80 = arith.constant 65535 : i32
    %235 = vector.broadcast %c65535_i32_80 : i32 to vector<8x128xi32>
    %236 = arith.andi %234, %235 : vector<8x128xi32>
    %237 = arith.xori %232, %236 : vector<8x128xi32>
    %c9_i32_81 = arith.constant 9 : i32
    %238 = vector.broadcast %c9_i32_81 : i32 to vector<8x128xi32>
    %239 = arith.shrsi %237, %238 : vector<8x128xi32>
    %c8388607_i32_82 = arith.constant 8388607 : i32
    %240 = vector.broadcast %c8388607_i32_82 : i32 to vector<8x128xi32>
    %241 = arith.andi %239, %240 : vector<8x128xi32>
    %242 = arith.sitofp %241 : vector<8x128xi32> to vector<8x128xf32>
    %cst_83 = arith.constant 5.000000e-01 : f32
    %243 = vector.broadcast %cst_83 : f32 to vector<8x128xf32>
    %244 = arith.addf %242, %243 : vector<8x128xf32>
    %cst_84 = arith.constant 1.1920929E-7 : f32
    %245 = vector.broadcast %cst_84 : f32 to vector<8x128xf32>
    %246 = arith.mulf %244, %245 : vector<8x128xf32>
    %247 = arith.addf %216, %246 : vector<8x128xf32>
    %c-239350328_i32 = arith.constant -239350328 : i32
    %248 = vector.broadcast %c-239350328_i32 : i32 to vector<8x128xi32>
    %249 = arith.addi %29, %248 : vector<8x128xi32>
    %c16_i32_85 = arith.constant 16 : i32
    %250 = vector.broadcast %c16_i32_85 : i32 to vector<8x128xi32>
    %251 = arith.shrsi %249, %250 : vector<8x128xi32>
    %c65535_i32_86 = arith.constant 65535 : i32
    %252 = vector.broadcast %c65535_i32_86 : i32 to vector<8x128xi32>
    %253 = arith.andi %251, %252 : vector<8x128xi32>
    %254 = arith.xori %249, %253 : vector<8x128xi32>
    %c2146121005_i32_87 = arith.constant 2146121005 : i32
    %255 = vector.broadcast %c2146121005_i32_87 : i32 to vector<8x128xi32>
    %256 = arith.muli %254, %255 : vector<8x128xi32>
    %c15_i32_88 = arith.constant 15 : i32
    %257 = vector.broadcast %c15_i32_88 : i32 to vector<8x128xi32>
    %258 = arith.shrsi %256, %257 : vector<8x128xi32>
    %c131071_i32_89 = arith.constant 131071 : i32
    %259 = vector.broadcast %c131071_i32_89 : i32 to vector<8x128xi32>
    %260 = arith.andi %258, %259 : vector<8x128xi32>
    %261 = arith.xori %256, %260 : vector<8x128xi32>
    %c-2073254261_i32_90 = arith.constant -2073254261 : i32
    %262 = vector.broadcast %c-2073254261_i32_90 : i32 to vector<8x128xi32>
    %263 = arith.muli %261, %262 : vector<8x128xi32>
    %c16_i32_91 = arith.constant 16 : i32
    %264 = vector.broadcast %c16_i32_91 : i32 to vector<8x128xi32>
    %265 = arith.shrsi %263, %264 : vector<8x128xi32>
    %c65535_i32_92 = arith.constant 65535 : i32
    %266 = vector.broadcast %c65535_i32_92 : i32 to vector<8x128xi32>
    %267 = arith.andi %265, %266 : vector<8x128xi32>
    %268 = arith.xori %263, %267 : vector<8x128xi32>
    %c9_i32_93 = arith.constant 9 : i32
    %269 = vector.broadcast %c9_i32_93 : i32 to vector<8x128xi32>
    %270 = arith.shrsi %268, %269 : vector<8x128xi32>
    %c8388607_i32_94 = arith.constant 8388607 : i32
    %271 = vector.broadcast %c8388607_i32_94 : i32 to vector<8x128xi32>
    %272 = arith.andi %270, %271 : vector<8x128xi32>
    %273 = arith.sitofp %272 : vector<8x128xi32> to vector<8x128xf32>
    %cst_95 = arith.constant 5.000000e-01 : f32
    %274 = vector.broadcast %cst_95 : f32 to vector<8x128xf32>
    %275 = arith.addf %273, %274 : vector<8x128xf32>
    %cst_96 = arith.constant 1.1920929E-7 : f32
    %276 = vector.broadcast %cst_96 : f32 to vector<8x128xf32>
    %277 = arith.mulf %275, %276 : vector<8x128xf32>
    %278 = arith.addf %247, %277 : vector<8x128xf32>
    %c-1879881855_i32 = arith.constant -1879881855 : i32
    %279 = vector.broadcast %c-1879881855_i32 : i32 to vector<8x128xi32>
    %280 = arith.addi %29, %279 : vector<8x128xi32>
    %c16_i32_97 = arith.constant 16 : i32
    %281 = vector.broadcast %c16_i32_97 : i32 to vector<8x128xi32>
    %282 = arith.shrsi %280, %281 : vector<8x128xi32>
    %c65535_i32_98 = arith.constant 65535 : i32
    %283 = vector.broadcast %c65535_i32_98 : i32 to vector<8x128xi32>
    %284 = arith.andi %282, %283 : vector<8x128xi32>
    %285 = arith.xori %280, %284 : vector<8x128xi32>
    %c2146121005_i32_99 = arith.constant 2146121005 : i32
    %286 = vector.broadcast %c2146121005_i32_99 : i32 to vector<8x128xi32>
    %287 = arith.muli %285, %286 : vector<8x128xi32>
    %c15_i32_100 = arith.constant 15 : i32
    %288 = vector.broadcast %c15_i32_100 : i32 to vector<8x128xi32>
    %289 = arith.shrsi %287, %288 : vector<8x128xi32>
    %c131071_i32_101 = arith.constant 131071 : i32
    %290 = vector.broadcast %c131071_i32_101 : i32 to vector<8x128xi32>
    %291 = arith.andi %289, %290 : vector<8x128xi32>
    %292 = arith.xori %287, %291 : vector<8x128xi32>
    %c-2073254261_i32_102 = arith.constant -2073254261 : i32
    %293 = vector.broadcast %c-2073254261_i32_102 : i32 to vector<8x128xi32>
    %294 = arith.muli %292, %293 : vector<8x128xi32>
    %c16_i32_103 = arith.constant 16 : i32
    %295 = vector.broadcast %c16_i32_103 : i32 to vector<8x128xi32>
    %296 = arith.shrsi %294, %295 : vector<8x128xi32>
    %c65535_i32_104 = arith.constant 65535 : i32
    %297 = vector.broadcast %c65535_i32_104 : i32 to vector<8x128xi32>
    %298 = arith.andi %296, %297 : vector<8x128xi32>
    %299 = arith.xori %294, %298 : vector<8x128xi32>
    %c9_i32_105 = arith.constant 9 : i32
    %300 = vector.broadcast %c9_i32_105 : i32 to vector<8x128xi32>
    %301 = arith.shrsi %299, %300 : vector<8x128xi32>
    %c8388607_i32_106 = arith.constant 8388607 : i32
    %302 = vector.broadcast %c8388607_i32_106 : i32 to vector<8x128xi32>
    %303 = arith.andi %301, %302 : vector<8x128xi32>
    %304 = arith.sitofp %303 : vector<8x128xi32> to vector<8x128xf32>
    %cst_107 = arith.constant 5.000000e-01 : f32
    %305 = vector.broadcast %cst_107 : f32 to vector<8x128xf32>
    %306 = arith.addf %304, %305 : vector<8x128xf32>
    %cst_108 = arith.constant 1.1920929E-7 : f32
    %307 = vector.broadcast %cst_108 : f32 to vector<8x128xf32>
    %308 = arith.mulf %306, %307 : vector<8x128xf32>
    %309 = arith.addf %278, %308 : vector<8x128xf32>
    %c774553914_i32 = arith.constant 774553914 : i32
    %310 = vector.broadcast %c774553914_i32 : i32 to vector<8x128xi32>
    %311 = arith.addi %29, %310 : vector<8x128xi32>
    %c16_i32_109 = arith.constant 16 : i32
    %312 = vector.broadcast %c16_i32_109 : i32 to vector<8x128xi32>
    %313 = arith.shrsi %311, %312 : vector<8x128xi32>
    %c65535_i32_110 = arith.constant 65535 : i32
    %314 = vector.broadcast %c65535_i32_110 : i32 to vector<8x128xi32>
    %315 = arith.andi %313, %314 : vector<8x128xi32>
    %316 = arith.xori %311, %315 : vector<8x128xi32>
    %c2146121005_i32_111 = arith.constant 2146121005 : i32
    %317 = vector.broadcast %c2146121005_i32_111 : i32 to vector<8x128xi32>
    %318 = arith.muli %316, %317 : vector<8x128xi32>
    %c15_i32_112 = arith.constant 15 : i32
    %319 = vector.broadcast %c15_i32_112 : i32 to vector<8x128xi32>
    %320 = arith.shrsi %318, %319 : vector<8x128xi32>
    %c131071_i32_113 = arith.constant 131071 : i32
    %321 = vector.broadcast %c131071_i32_113 : i32 to vector<8x128xi32>
    %322 = arith.andi %320, %321 : vector<8x128xi32>
    %323 = arith.xori %318, %322 : vector<8x128xi32>
    %c-2073254261_i32_114 = arith.constant -2073254261 : i32
    %324 = vector.broadcast %c-2073254261_i32_114 : i32 to vector<8x128xi32>
    %325 = arith.muli %323, %324 : vector<8x128xi32>
    %c16_i32_115 = arith.constant 16 : i32
    %326 = vector.broadcast %c16_i32_115 : i32 to vector<8x128xi32>
    %327 = arith.shrsi %325, %326 : vector<8x128xi32>
    %c65535_i32_116 = arith.constant 65535 : i32
    %328 = vector.broadcast %c65535_i32_116 : i32 to vector<8x128xi32>
    %329 = arith.andi %327, %328 : vector<8x128xi32>
    %330 = arith.xori %325, %329 : vector<8x128xi32>
    %c9_i32_117 = arith.constant 9 : i32
    %331 = vector.broadcast %c9_i32_117 : i32 to vector<8x128xi32>
    %332 = arith.shrsi %330, %331 : vector<8x128xi32>
    %c8388607_i32_118 = arith.constant 8388607 : i32
    %333 = vector.broadcast %c8388607_i32_118 : i32 to vector<8x128xi32>
    %334 = arith.andi %332, %333 : vector<8x128xi32>
    %335 = arith.sitofp %334 : vector<8x128xi32> to vector<8x128xf32>
    %cst_119 = arith.constant 5.000000e-01 : f32
    %336 = vector.broadcast %cst_119 : f32 to vector<8x128xf32>
    %337 = arith.addf %335, %336 : vector<8x128xf32>
    %cst_120 = arith.constant 1.1920929E-7 : f32
    %338 = vector.broadcast %cst_120 : f32 to vector<8x128xf32>
    %339 = arith.mulf %337, %338 : vector<8x128xf32>
    %340 = arith.addf %309, %339 : vector<8x128xf32>
    %c-865977613_i32 = arith.constant -865977613 : i32
    %341 = vector.broadcast %c-865977613_i32 : i32 to vector<8x128xi32>
    %342 = arith.addi %29, %341 : vector<8x128xi32>
    %c16_i32_121 = arith.constant 16 : i32
    %343 = vector.broadcast %c16_i32_121 : i32 to vector<8x128xi32>
    %344 = arith.shrsi %342, %343 : vector<8x128xi32>
    %c65535_i32_122 = arith.constant 65535 : i32
    %345 = vector.broadcast %c65535_i32_122 : i32 to vector<8x128xi32>
    %346 = arith.andi %344, %345 : vector<8x128xi32>
    %347 = arith.xori %342, %346 : vector<8x128xi32>
    %c2146121005_i32_123 = arith.constant 2146121005 : i32
    %348 = vector.broadcast %c2146121005_i32_123 : i32 to vector<8x128xi32>
    %349 = arith.muli %347, %348 : vector<8x128xi32>
    %c15_i32_124 = arith.constant 15 : i32
    %350 = vector.broadcast %c15_i32_124 : i32 to vector<8x128xi32>
    %351 = arith.shrsi %349, %350 : vector<8x128xi32>
    %c131071_i32_125 = arith.constant 131071 : i32
    %352 = vector.broadcast %c131071_i32_125 : i32 to vector<8x128xi32>
    %353 = arith.andi %351, %352 : vector<8x128xi32>
    %354 = arith.xori %349, %353 : vector<8x128xi32>
    %c-2073254261_i32_126 = arith.constant -2073254261 : i32
    %355 = vector.broadcast %c-2073254261_i32_126 : i32 to vector<8x128xi32>
    %356 = arith.muli %354, %355 : vector<8x128xi32>
    %c16_i32_127 = arith.constant 16 : i32
    %357 = vector.broadcast %c16_i32_127 : i32 to vector<8x128xi32>
    %358 = arith.shrsi %356, %357 : vector<8x128xi32>
    %c65535_i32_128 = arith.constant 65535 : i32
    %359 = vector.broadcast %c65535_i32_128 : i32 to vector<8x128xi32>
    %360 = arith.andi %358, %359 : vector<8x128xi32>
    %361 = arith.xori %356, %360 : vector<8x128xi32>
    %c9_i32_129 = arith.constant 9 : i32
    %362 = vector.broadcast %c9_i32_129 : i32 to vector<8x128xi32>
    %363 = arith.shrsi %361, %362 : vector<8x128xi32>
    %c8388607_i32_130 = arith.constant 8388607 : i32
    %364 = vector.broadcast %c8388607_i32_130 : i32 to vector<8x128xi32>
    %365 = arith.andi %363, %364 : vector<8x128xi32>
    %366 = arith.sitofp %365 : vector<8x128xi32> to vector<8x128xf32>
    %cst_131 = arith.constant 5.000000e-01 : f32
    %367 = vector.broadcast %cst_131 : f32 to vector<8x128xf32>
    %368 = arith.addf %366, %367 : vector<8x128xf32>
    %cst_132 = arith.constant 1.1920929E-7 : f32
    %369 = vector.broadcast %cst_132 : f32 to vector<8x128xf32>
    %370 = arith.mulf %368, %369 : vector<8x128xf32>
    %371 = arith.addf %340, %370 : vector<8x128xf32>
    %c1788458156_i32 = arith.constant 1788458156 : i32
    %372 = vector.broadcast %c1788458156_i32 : i32 to vector<8x128xi32>
    %373 = arith.addi %29, %372 : vector<8x128xi32>
    %c16_i32_133 = arith.constant 16 : i32
    %374 = vector.broadcast %c16_i32_133 : i32 to vector<8x128xi32>
    %375 = arith.shrsi %373, %374 : vector<8x128xi32>
    %c65535_i32_134 = arith.constant 65535 : i32
    %376 = vector.broadcast %c65535_i32_134 : i32 to vector<8x128xi32>
    %377 = arith.andi %375, %376 : vector<8x128xi32>
    %378 = arith.xori %373, %377 : vector<8x128xi32>
    %c2146121005_i32_135 = arith.constant 2146121005 : i32
    %379 = vector.broadcast %c2146121005_i32_135 : i32 to vector<8x128xi32>
    %380 = arith.muli %378, %379 : vector<8x128xi32>
    %c15_i32_136 = arith.constant 15 : i32
    %381 = vector.broadcast %c15_i32_136 : i32 to vector<8x128xi32>
    %382 = arith.shrsi %380, %381 : vector<8x128xi32>
    %c131071_i32_137 = arith.constant 131071 : i32
    %383 = vector.broadcast %c131071_i32_137 : i32 to vector<8x128xi32>
    %384 = arith.andi %382, %383 : vector<8x128xi32>
    %385 = arith.xori %380, %384 : vector<8x128xi32>
    %c-2073254261_i32_138 = arith.constant -2073254261 : i32
    %386 = vector.broadcast %c-2073254261_i32_138 : i32 to vector<8x128xi32>
    %387 = arith.muli %385, %386 : vector<8x128xi32>
    %c16_i32_139 = arith.constant 16 : i32
    %388 = vector.broadcast %c16_i32_139 : i32 to vector<8x128xi32>
    %389 = arith.shrsi %387, %388 : vector<8x128xi32>
    %c65535_i32_140 = arith.constant 65535 : i32
    %390 = vector.broadcast %c65535_i32_140 : i32 to vector<8x128xi32>
    %391 = arith.andi %389, %390 : vector<8x128xi32>
    %392 = arith.xori %387, %391 : vector<8x128xi32>
    %c9_i32_141 = arith.constant 9 : i32
    %393 = vector.broadcast %c9_i32_141 : i32 to vector<8x128xi32>
    %394 = arith.shrsi %392, %393 : vector<8x128xi32>
    %c8388607_i32_142 = arith.constant 8388607 : i32
    %395 = vector.broadcast %c8388607_i32_142 : i32 to vector<8x128xi32>
    %396 = arith.andi %394, %395 : vector<8x128xi32>
    %397 = arith.sitofp %396 : vector<8x128xi32> to vector<8x128xf32>
    %cst_143 = arith.constant 5.000000e-01 : f32
    %398 = vector.broadcast %cst_143 : f32 to vector<8x128xf32>
    %399 = arith.addf %397, %398 : vector<8x128xf32>
    %cst_144 = arith.constant 1.1920929E-7 : f32
    %400 = vector.broadcast %cst_144 : f32 to vector<8x128xf32>
    %401 = arith.mulf %399, %400 : vector<8x128xf32>
    %402 = arith.addf %371, %401 : vector<8x128xf32>
    %cst_145 = arith.constant 6.000000e+00 : f32
    %403 = vector.broadcast %cst_145 : f32 to vector<8x128xf32>
    %404 = arith.subf %402, %403 : vector<8x128xf32>
    %c8_i32 = arith.constant 8 : i32
    %405 = vector.broadcast %c8_i32 : i32 to vector<8x128xi32>
    %406 = arith.cmpi slt, %2, %405 : vector<8x128xi32>
    %cst_146 = arith.constant 0xFF800000 : f32
    %407 = vector.broadcast %cst_146 : f32 to vector<8x128xf32>
    %408 = arith.select %406, %404, %407 : vector<8x128xi1>, vector<8x128xf32>
    %cst_147 = arith.constant dense<0xFF800000> : vector<8xf32>
    %409 = vector.multi_reduction <maximumf>, %408, %cst_147 [1] : vector<8x128xf32> to vector<8xf32>
    %410 = vector.shape_cast %409 : vector<8xf32> to vector<8x1xf32>
    %411 = vector.broadcast %410 : vector<8x1xf32> to vector<8x128xf32>
    %412 = arith.subf %408, %411 : vector<8x128xf32>
    %413 = math.exp %412 : vector<8x128xf32>
    %cst_148 = arith.constant dense<0.000000e+00> : vector<8xf32>
    %414 = vector.multi_reduction <add>, %413, %cst_148 [1] : vector<8x128xf32> to vector<8xf32>
    %415 = vector.shape_cast %414 : vector<8xf32> to vector<8x1xf32>
    %416 = vector.broadcast %415 : vector<8x1xf32> to vector<8x128xf32>
    %417 = arith.divf %413, %416 : vector<8x128xf32>
    %418 = vector.extract_strided_slice %417 {offsets = [0, 0], sizes = [8, 8], strides = [1, 1]} : vector<8x128xf32> to vector<8x8xf32>
    %c0_149 = arith.constant 0 : index
    %c0_150 = arith.constant 0 : index
    %419 = vector.load %arg1[%c0_149, %c0_150] : memref<8x8xf32, #tpu.memory_space<vmem>>, vector<8x8xf32>
    tpu.vector_store %arg1[%c0_149, %c0_150], %418 {strides = array<i32>} : memref<8x8xf32, #tpu.memory_space<vmem>>, vector<8x8xf32>,
    return
  }
}

</mosaic_0001>

<llo_original>
// kernel: _forward_impl.1
$region0: #{_forward_impl.1}
  #allocation0 [shape = 'u32[]', space=smem, size = 0x4, offset = 0x4, fixed_abs, tag = 'smem constant byte address 0x4 - core index']
  #allocation1 [shape = 'u32[144,128]{1,0:T(1,128)}', space=vmem, size = 0x12000, scoped, tag = 'internal scratch']
  #allocation2 [shape = 's32[1]{0:T(128)S(6)}', space=smem, size = 0x200, scoped, tag = 'scoped memory for _forward_impl.1']
  %s0 = inlined_call_operand.<no memory space> [shape: s32[1], index: 0, kind: input, shape index: {}]
  %s1 = inlined_call_operand.vmem [shape: f32[8,8], index: 1, kind: output, shape index: {}]
  %s2 = sld [smem:[#allocation0]]
  $region14: #{_forward_impl.1} parent=0
    _
  %s4 = ssub.s32 1, %s2
  %s5 = scalar_select 0, %s4, %s2
  %6 = sst [smem:[#allocation2]] %s0
  // Predicated region
  $region2: #{_forward_impl.1} parent=0 // pred_check
    _
  $region3: #{_forward_impl.1} parent=0 // pred_check_branch
    %8 = sbr.rel (0) target = $region5
  $region4: #{_forward_impl.1} parent=0 // pred_region
    _
  $region5: #{_forward_impl.1} parent=0 // pred_fallthru
    _
  %s9 = sld [smem:[#allocation2]]
  %v10 = vlaneseq
  %v11 = vshrl.u32 %v10, 7
  %v12 = vlaneseq
  %v13 = vand.u32 %v12, 127
  %s14 = smul.u32 %s9, 2654435769
  %v15 = vmul.u32 %v11, 2246822507
  %v16 = vstv %s14
  %v17 = vadd.s32 %v16, %v15
  %v18 = vmul.u32 %v13, 3266489909
  %v19 = vadd.s32 %v17, %v18
  %v20 = vshra.s32 %v19, 16
  %v21 = vand.u32 %v20, 65535
  %v22 = vxor.u32 %v19, %v21
  %v23 = vmul.u32 %v22, 2146121005
  %v24 = vshra.s32 %v23, 15
  %v25 = vand.u32 %v24, 131071
  %v26 = vxor.u32 %v23, %v25
  %v27 = vmul.u32 %v26, 2221713035
  %v28 = vshra.s32 %v27, 16
  %v29 = vand.u32 %v28, 65535
  %v30 = vxor.u32 %v27, %v29
  %v31 = vadd.s32 %v30, 2654435769
  %v32 = vshra.s32 %v31, 16
  %v33 = vand.u32 %v32, 65535
  %v34 = vxor.u32 %v31, %v33
  %v35 = vmul.u32 %v34, 2146121005
  %v36 = vshra.s32 %v35, 15
  %v37 = vand.u32 %v36, 131071
  %v38 = vxor.u32 %v35, %v37
  %v39 = vmul.u32 %v38, 2221713035
  %v40 = vshra.s32 %v39, 16
  %v41 = vand.u32 %v40, 65535
  %v42 = vxor.u32 %v39, %v41
  %v43 = vshra.s32 %v42, 9
  %v44 = vand.u32 %v43, 8388607
  %v45 = vcvt.s32.f32 %v44
  %v46 = vadd.f32 %v45, 0.5
  %v47 = vmul.f32 %v46, 1.1920929e-07
  %v48 = vadd.f32 %v47, 0.0
  %v49 = vadd.s32 %v30, 1013904242
  %v50 = vshra.s32 %v49, 16
  %v51 = vand.u32 %v50, 65535
  %v52 = vxor.u32 %v49, %v51
  %v53 = vmul.u32 %v52, 2146121005
  %v54 = vshra.s32 %v53, 15
  %v55 = vand.u32 %v54, 131071
  %v56 = vxor.u32 %v53, %v55
  %v57 = vmul.u32 %v56, 2221713035
  %v58 = vshra.s32 %v57, 16
  %v59 = vand.u32 %v58, 65535
  %v60 = vxor.u32 %v57, %v59
  %v61 = vshra.s32 %v60, 9
  %v62 = vand.u32 %v61, 8388607
  %v63 = vcvt.s32.f32 %v62
  %v64 = vadd.f32 %v63, 0.5
  %v65 = vmul.f32 %v64, 1.1920929e-07
  %v66 = vadd.f32 %v48, %v65
  %v67 = vadd.s32 %v30, 3668340011
  %v68 = vshra.s32 %v67, 16
  %v69 = vand.u32 %v68, 65535
  %v70 = vxor.u32 %v67, %v69
  %v71 = vmul.u32 %v70, 2146121005
  %v72 = vshra.s32 %v71, 15
  %v73 = vand.u32 %v72, 131071
  %v74 = vxor.u32 %v71, %v73
  %v75 = vmul.u32 %v74, 2221713035
  %v76 = vshra.s32 %v75, 16
  %v77 = vand.u32 %v76, 65535
  %v78 = vxor.u32 %v75, %v77
  %v79 = vshra.s32 %v78, 9
  %v80 = vand.u32 %v79, 8388607
  %v81 = vcvt.s32.f32 %v80
  %v82 = vadd.f32 %v81, 0.5
  %v83 = vmul.f32 %v82, 1.1920929e-07
  %v84 = vadd.f32 %v66, %v83
  %v85 = vadd.s32 %v30, 2027808484
  %v86 = vshra.s32 %v85, 16
  %v87 = vand.u32 %v86, 65535
  %v88 = vxor.u32 %v85, %v87
  %v89 = vmul.u32 %v88, 2146121005
  %v90 = vshra.s32 %v89, 15
  %v91 = vand.u32 %v90, 131071
  %v92 = vxor.u32 %v89, %v91
  %v93 = vmul.u32 %v92, 2221713035
  %v94 = vshra.s32 %v93, 16
  %v95 = vand.u32 %v94, 65535
  %v96 = vxor.u32 %v93, %v95
  %v97 = vshra.s32 %v96, 9
  %v98 = vand.u32 %v97, 8388607
  %v99 = vcvt.s32.f32 %v98
  %v100 = vadd.f32 %v99, 0.5
  %v101 = vmul.f32 %v100, 1.1920929e-07
  %v102 = vadd.f32 %v84, %v101
  %v103 = vadd.s32 %v30, 387276957
  %v104 = vshra.s32 %v103, 16
  %v105 = vand.u32 %v104, 65535
  %v106 = vxor.u32 %v103, %v105
  %v107 = vmul.u32 %v106, 2146121005
  %v108 = vshra.s32 %v107, 15
  %v109 = vand.u32 %v108, 131071
  %v110 = vxor.u32 %v107, %v109
  %v111 = vmul.u32 %v110, 2221713035
  %v112 = vshra.s32 %v111, 16
  %v113 = vand.u32 %v112, 65535
  %v114 = vxor.u32 %v111, %v113
  %v115 = vshra.s32 %v114, 9
  %v116 = vand.u32 %v115, 8388607
  %v117 = vcvt.s32.f32 %v116
  %v118 = vadd.f32 %v117, 0.5
  %v119 = vmul.f32 %v118, 1.1920929e-07
  %v120 = vadd.f32 %v102, %v119
  %v121 = vadd.s32 %v30, 3041712726
  %v122 = vshra.s32 %v121, 16
  %v123 = vand.u32 %v122, 65535
  %v124 = vxor.u32 %v121, %v123
  %v125 = vmul.u32 %v124, 2146121005
  %v126 = vshra.s32 %v125, 15
  %v127 = vand.u32 %v126, 131071
  %v128 = vxor.u32 %v125, %v127
  %v129 = vmul.u32 %v128, 2221713035
  %v130 = vshra.s32 %v129, 16
  %v131 = vand.u32 %v130, 65535
  %v132 = vxor.u32 %v129, %v131
  %v133 = vshra.s32 %v132, 9
  %v134 = vand.u32 %v133, 8388607
  %v135 = vcvt.s32.f32 %v134
  %v136 = vadd.f32 %v135, 0.5
  %v137 = vmul.f32 %v136, 1.1920929e-07
  %v138 = vadd.f32 %v120, %v137
  %v139 = vadd.s32 %v30, 1401181199
  %v140 = vshra.s32 %v139, 16
  %v141 = vand.u32 %v140, 65535
  %v142 = vxor.u32 %v139, %v141
  %v143 = vmul.u32 %v142, 2146121005
  %v144 = vshra.s32 %v143, 15
  %v145 = vand.u32 %v144, 131071
  %v146 = vxor.u32 %v143, %v145
  %v147 = vmul.u32 %v146, 2221713035
  %v148 = vshra.s32 %v147, 16
  %v149 = vand.u32 %v148, 65535
  %v150 = vxor.u32 %v147, %v149
  %v151 = vshra.s32 %v150, 9
  %v152 = vand.u32 %v151, 8388607
  %v153 = vcvt.s32.f32 %v152
  %v154 = vadd.f32 %v153, 0.5
  %v155 = vmul.f32 %v154, 1.1920929e-07
  %v156 = vadd.f32 %v138, %v155
  %v157 = vadd.s32 %v30, 4055616968
  %v158 = vshra.s32 %v157, 16
  %v159 = vand.u32 %v158, 65535
  %v160 = vxor.u32 %v157, %v159
  %v161 = vmul.u32 %v160, 2146121005
  %v162 = vshra.s32 %v161, 15
  %v163 = vand.u32 %v162, 131071
  %v164 = vxor.u32 %v161, %v163
  %v165 = vmul.u32 %v164, 2221713035
  %v166 = vshra.s32 %v165, 16
  %v167 = vand.u32 %v166, 65535
  %v168 = vxor.u32 %v165, %v167
  %v169 = vshra.s32 %v168, 9
  %v170 = vand.u32 %v169, 8388607
  %v171 = vcvt.s32.f32 %v170
  %v172 = vadd.f32 %v171, 0.5
  %v173 = vmul.f32 %v172, 1.1920929e-07
  %v174 = vadd.f32 %v156, %v173
  %v175 = vadd.s32 %v30, 2415085441
  %v176 = vshra.s32 %v175, 16
  %v177 = vand.u32 %v176, 65535
  %v178 = vxor.u32 %v175, %v177
  %v179 = vmul.u32 %v178, 2146121005
  %v180 = vshra.s32 %v179, 15
  %v181 = vand.u32 %v180, 131071
  %v182 = vxor.u32 %v179, %v181
  %v183 = vmul.u32 %v182, 2221713035
  %v184 = vshra.s32 %v183, 16
  %v185 = vand.u32 %v184, 65535
  %v186 = vxor.u32 %v183, %v185
  %v187 = vshra.s32 %v186, 9
  %v188 = vand.u32 %v187, 8388607
  %v189 = vcvt.s32.f32 %v188
  %v190 = vadd.f32 %v189, 0.5
  %v191 = vmul.f32 %v190, 1.1920929e-07
  %v192 = vadd.f32 %v174, %v191
  %v193 = vadd.s32 %v30, 774553914
  %v194 = vshra.s32 %v193, 16
  %v195 = vand.u32 %v194, 65535
  %v196 = vxor.u32 %v193, %v195
  %v197 = vmul.u32 %v196, 2146121005
  %v198 = vshra.s32 %v197, 15
  %v199 = vand.u32 %v198, 131071
  %v200 = vxor.u32 %v197, %v199
  %v201 = vmul.u32 %v200, 2221713035
  %v202 = vshra.s32 %v201, 16
  %v203 = vand.u32 %v202, 65535
  %v204 = vxor.u32 %v201, %v203
  %v205 = vshra.s32 %v204, 9
  %v206 = vand.u32 %v205, 8388607
  %v207 = vcvt.s32.f32 %v206
  %v208 = vadd.f32 %v207, 0.5
  %v209 = vmul.f32 %v208, 1.1920929e-07
  %v210 = vadd.f32 %v192, %v209
  %v211 = vadd.s32 %v30, 3428989683
  %v212 = vshra.s32 %v211, 16
  %v213 = vand.u32 %v212, 65535
  %v214 = vxor.u32 %v211, %v213
  %v215 = vmul.u32 %v214, 2146121005
  %v216 = vshra.s32 %v215, 15
  %v217 = vand.u32 %v216, 131071
  %v218 = vxor.u32 %v215, %v217
  %v219 = vmul.u32 %v218, 2221713035
  %v220 = vshra.s32 %v219, 16
  %v221 = vand.u32 %v220, 65535
  %v222 = vxor.u32 %v219, %v221
  %v223 = vshra.s32 %v222, 9
  %v224 = vand.u32 %v223, 8388607
  %v225 = vcvt.s32.f32 %v224
  %v226 = vadd.f32 %v225, 0.5
  %v227 = vmul.f32 %v226, 1.1920929e-07
  %v228 = vadd.f32 %v210, %v227
  %v229 = vadd.s32 %v30, 1788458156
  %v230 = vshra.s32 %v229, 16
  %v231 = vand.u32 %v230, 65535
  %v232 = vxor.u32 %v229, %v231
  %v233 = vmul.u32 %v232, 2146121005
  %v234 = vshra.s32 %v233, 15
  %v235 = vand.u32 %v234, 131071
  %v236 = vxor.u32 %v233, %v235
  %v237 = vmul.u32 %v236, 2221713035
  %v238 = vshra.s32 %v237, 16
  %v239 = vand.u32 %v238, 65535
  %v240 = vxor.u32 %v237, %v239
  %v241 = vshra.s32 %v240, 9
  %v242 = vand.u32 %v241, 8388607
  %v243 = vcvt.s32.f32 %v242
  %v244 = vadd.f32 %v243, 0.5
  %v245 = vmul.f32 %v244, 1.1920929e-07
  %v246 = vadd.f32 %v228, %v245
  %v247 = vsub.f32 %v246, 6.0
  %vm248 = vcmp.lt.s32.totalorder %v13, 8
  %v249 = vsel %vm248, %v247, -inf
  %250 = vmax.xlane.f32.xlu0 %v249
  %v251 = vpop.xlane.xlu0 %250
  %v252 = vsub.f32 %v249, %v251
  %v253 = vmul.f32 %v252, 1.442695
  %v254 = vpow.pop %v253
  %255 = vadd.xlane.f32.xlu0 %v254
  %v256 = vpop.xlane.xlu0 %255
  %v257 = vrcp.pop %v256
  %v258 = vmul.f32 %v254, %v257
  %vm259 = vcmask 64512
  %260 = vst.msk [vmem:[%s1] sm:$0xff] %vm259, %v258
  // Predicated region
  $region6: #{_forward_impl.1} parent=0 // pred_check
    _
  $region7: #{_forward_impl.1} parent=0 // pred_check_branch
    %262 = sbr.rel (0) target = $region9
  $region8: #{_forward_impl.1} parent=0 // pred_region
    _
  $region9: #{_forward_impl.1} parent=0 // pred_fallthru
    _
  // Predicated region
  $region10: #{_forward_impl.1} parent=0 // pred_check
    _
  $region11: #{_forward_impl.1} parent=0 // pred_check_branch
    %264 = sbr.rel (0) target = $region13
  $region12: #{_forward_impl.1} parent=0 // pred_region
    _
  $region13: #{_forward_impl.1} parent=0 // pred_fallthru
    _

</llo_original>
